<compile_context>
chip_gen: v5e
topology: v5e:2x2
jax: 0.10.0
libtpu: 0.0.40
codegen_flags: <defaults>
</compile_context>

<pallas_src>
import functools

import numpy as np

import jax
import jax.numpy as jnp
from jax.experimental import pallas as pl
from jax.experimental.pallas import tpu as pltpu

LRELU_SLOPE = 0.1

PERIODS = (2, 3, 5, 7, 11)                       # MultiPeriodDiscriminator
FFTS = (1024, 2048, 512)                         # MultiResSpecDiscriminator
HOPS = (120, 240, 50)
WINS = (600, 1200, 240)

MPD_CHANNELS = ((1, 32), (32, 128), (128, 512), (512, 1024), (1024, 1024))
MSD_CONV_SPECS = [(1, 32, 3, 9), (32, 32, 3, 9), (32, 32, 3, 9), (32, 32, 3, 9), (32, 32, 3, 3)]


def _rup(x, m):
    return ((x + m - 1) // m) * m


# ----------------------------- Pallas kernels -----------------------------

def _conv_tap_kernel(x_ref, w_ref, b_ref, o_ref, *, taps, orow, sw, sh, apply_act, slope):
    """Tap-decomposed conv: for each (kh,kw) tap, 2-D slab [orow, Cin] @ [Cin, CT]."""
    ow = pl.program_id(1)
    acc = None
    for t, (qw, rw, qh, rh) in enumerate(taps):
        g = ((ow + qw) * sw + rw) * sh + rh          # index into the stride-phase groups
        slab = x_ref[0, g, pl.ds(qh, orow), :]       # [orow, Cin]  (bf16)
        y = jnp.dot(slab, w_ref[t], preferred_element_type=jnp.float32)
        acc = y if acc is None else acc + y
    acc = acc + b_ref[...]                           # [1, CT] broadcast
    if apply_act:
        acc = jnp.where(acc >= 0, acc, acc * slope)
    o_ref[0, 0] = acc


def _mm_small_k_kernel(x_ref, w_ref, b_ref, o_ref, *, apply_act, slope):
    """Single-shot matmul for the Cin==1 first convs (K = 5 or 27, full extent)."""
    y = jnp.dot(x_ref[...], w_ref[...], preferred_element_type=jnp.float32) + b_ref[...]
    if apply_act:
        y = jnp.where(y >= 0, y, y * slope)
    o_ref[...] = y


def _stft_mag_kernel(yg_ref, basis_ref, o_ref, *, nc, n_frames, nf_pad):
    """Frames are built implicitly: chunk c of frame t = hop-group (t + c)."""
    acc = None
    for c in range(nc):
        slab = yg_ref[0, pl.ds(c, n_frames), :]      # [n_frames, hop]
        y = jnp.dot(slab, basis_ref[c], preferred_element_type=jnp.float32)
        acc = y if acc is None else acc + y
    re = acc[:, :nf_pad]
    im = acc[:, nf_pad:]
    o_ref[0] = jnp.sqrt(jnp.maximum(re * re + im * im, 1e-8))  # TorchSTFT clamp min=1e-8


# ----------------------------- conv wrappers -----------------------------

def _conv2d_taps(x, w, b, stride, padding, act):
    """NCHW conv2d (zero padding), Cin >= 32 path: in-kernel tap accumulation."""
    B, Cin, H, W = x.shape
    Cout, _, kh, kw = w.shape
    sh, sw = stride
    ph, pw = padding
    OH = (H + 2 * ph - kh) // sh + 1
    OW = (W + 2 * pw - kw) // sw + 1
    qh_max = (kh - 1) // sh
    qw_max = (kw - 1) // sw
    ROWG = max(-(-(H + 2 * ph) // sh), OH + qh_max)
    COLG = max(-(-(W + 2 * pw) // sw), OW + qw_max)
    Hp, Wp = ROWG * sh, COLG * sw

    xp = jnp.pad(x, ((0, 0), (0, 0), (ph, Hp - H - ph), (pw, Wp - W - pw)))
    # -> [B, COLG, sw, sh, ROWG, Cin] -> [B, COLG*sw*sh, ROWG, Cin]  (same size as input)
    x4 = xp.reshape(B, Cin, ROWG, sh, COLG, sw).transpose(0, 4, 5, 3, 2, 1)
    G2 = COLG * sw * sh
    x4 = x4.reshape(B, G2, ROWG, Cin).astype(jnp.bfloat16)

    wt = w.transpose(2, 3, 1, 0).reshape(kh * kw, Cin, Cout).astype(jnp.bfloat16)
    bt = b.reshape(1, Cout).astype(jnp.float32)

    CT = min(Cout, 256)                              # 256-wide lanes for v6e/v7x MXU
    n_ct = Cout // CT
    taps = [(j // sw, j % sw, i // sh, i % sh) for i in range(kh) for j in range(kw)]

    kernel = functools.partial(_conv_tap_kernel, taps=taps, orow=OH, sw=sw, sh=sh,
                               apply_act=act, slope=LRELU_SLOPE)
    out = pl.pallas_call(
        kernel,
        out_shape=jax.ShapeDtypeStruct((B, OW, OH, Cout), jnp.float32),
        grid_spec=pltpu.PrefetchScalarGridSpec(
            num_scalar_prefetch=0,
            grid=(B, OW, n_ct),
            in_specs=[pl.BlockSpec((1, G2, ROWG, Cin), lambda bb, ow, ct: (bb, 0, 0, 0)),
                      pl.BlockSpec((kh * kw, Cin, CT), lambda bb, ow, ct: (0, 0, ct)),
                      pl.BlockSpec((1, CT), lambda bb, ow, ct: (0, ct))],
            out_specs=pl.BlockSpec((1, 1, OH, CT), lambda bb, ow, ct: (bb, ow, 0, ct))),
        compiler_params=pltpu.CompilerParams(
            dimension_semantics=("parallel", "parallel", "parallel")),
    )(x4, wt, bt)
    return out.transpose(0, 3, 2, 1)                 # -> NCHW [B, Cout, OH, OW]


def _im2col(x, kh, kw, sh, sw, ph, pw):
    """x: NCHW -> patches [B*OH*OW, C*kh*kw] (C-major, then kh, kw: torch weight layout)."""
    B, C, H, W = x.shape
    xp = jnp.pad(x, ((0, 0), (0, 0), (ph, ph), (pw, pw)))
    OH = (H + 2 * ph - kh) // sh + 1
    OW = (W + 2 * pw - kw) // sw + 1
    cols = []
    for i in range(kh):
        for j in range(kw):
            cols.append(xp[:, :, i:i + sh * OH:sh, j:j + sw * OW:sw])
    p = jnp.stack(cols, axis=0).reshape(kh, kw, B, C, OH, OW)
    p = p.transpose(2, 4, 5, 3, 0, 1).reshape(B * OH * OW, C * kh * kw)
    return p, OH, OW


def _conv2d_im2col(x, w, b, stride, padding, act, tm=512):
    """Cin == 1 first-layer path: small im2col, K kept at full extent (no 128-padding)."""
    Cout, Cin, kh, kw = w.shape
    patches, OH, OW = _im2col(x, kh, kw, stride[0], stride[1], padding[0], padding[1])
    M, K = patches.shape
    Mp = _rup(M, tm)
    xp = jnp.pad(patches, ((0, Mp - M), (0, 0))).astype(jnp.bfloat16)
    wm = w.reshape(Cout, K).T.astype(jnp.bfloat16)
    bt = b.reshape(1, Cout).astype(jnp.float32)
    kernel = functools.partial(_mm_small_k_kernel, apply_act=act, slope=LRELU_SLOPE)
    out = pl.pallas_call(
        kernel,
        out_shape=jax.ShapeDtypeStruct((Mp, Cout), jnp.float32),
        grid_spec=pltpu.PrefetchScalarGridSpec(
            num_scalar_prefetch=0,
            grid=(Mp // tm,),
            in_specs=[pl.BlockSpec((tm, K), lambda m: (m, 0)),
                      pl.BlockSpec((K, Cout), lambda m: (0, 0)),
                      pl.BlockSpec((1, Cout), lambda m: (0, 0))],
            out_specs=pl.BlockSpec((tm, Cout), lambda m: (m, 0))),
        compiler_params=pltpu.CompilerParams(dimension_semantics=("parallel",)),
    )(xp, wm, bt)
    out = out[:M]
    B = x.shape[0]
    return out.reshape(B, OH, OW, Cout).transpose(0, 3, 1, 2)


def conv2d_pallas(x, w, b, stride, padding, act):
    if w.shape[1] == 1:          # Cin == 1 -> tiny-K im2col path
        return _conv2d_im2col(x, w, b, stride, padding, act)
    return _conv2d_taps(x, w, b, stride, padding, act)


# ----------------------------- STFT magnitude -----------------------------

@functools.lru_cache(maxsize=None)
def _stft_basis(n_fft, hop, win_length):
    """Window-folded DFT basis, fused [cos | -sin], hop-chunked, zero-padded tail."""
    nc = -(-n_fft // hop)                            # chunks per frame
    nf = n_fft // 2 + 1
    nf_pad = _rup(nf, 128)
    n = np.arange(n_fft, dtype=np.float64)[:, None]
    k = np.arange(nf, dtype=np.float64)[None, :]
    ang = 2.0 * np.pi * n * k / n_fft
    win = 0.5 - 0.5 * np.cos(2.0 * np.pi * np.arange(win_length, dtype=np.float64) / win_length)
    off = (n_fft - win_length) // 2
    wfull = np.zeros((n_fft,), np.float64)
    wfull[off:off + win_length] = win
    basis = np.zeros((nc * hop, 2 * nf_pad), dtype=np.float32)
    basis[:n_fft, :nf] = (wfull[:, None] * np.cos(ang)).astype(np.float32)
    basis[:n_fft, nf_pad:nf_pad + nf] = (-(wfull[:, None] * np.sin(ang))).astype(np.float32)
    basis = basis.reshape(nc, hop, 2 * nf_pad)
    return jnp.asarray(basis, dtype=jnp.bfloat16), nc, nf, nf_pad


def stft_mag_pallas(y, n_fft, hop, win_length):
    """Magnitude STFT, center=True reflect pad, hann(win_length) zero-padded to n_fft.
    y: [B, T] -> [B, n_fft//2+1, n_frames] (torch.stft layout)."""
    B, T = y.shape
    basis, nc, nf, nf_pad = _stft_basis(n_fft, hop, win_length)
    pad = n_fft // 2
    yp = jnp.pad(y, ((0, 0), (pad, pad)), mode="reflect")
    n_frames = 1 + T // hop
    Tg = n_frames + nc - 1
    need = Tg * hop
    cur = yp.shape[1]
    if cur < need:
        yp = jnp.pad(yp, ((0, 0), (0, need - cur)))
    else:
        yp = yp[:, :need]                            # unused tail (only zero basis rows touch it)
    yg = yp.reshape(B, Tg, hop).astype(jnp.bfloat16)

    kernel = functools.partial(_stft_mag_kernel, nc=nc, n_frames=n_frames, nf_pad=nf_pad)
    out = pl.pallas_call(
        kernel,
        out_shape=jax.ShapeDtypeStruct((B, n_frames, nf_pad), jnp.float32),
        grid_spec=pltpu.PrefetchScalarGridSpec(
            num_scalar_prefetch=0,
            grid=(B,),
            in_specs=[pl.BlockSpec((1, Tg, hop), lambda b: (b, 0, 0)),
                      pl.BlockSpec((nc, hop, 2 * nf_pad), lambda b: (0, 0, 0))],
            out_specs=pl.BlockSpec((1, n_frames, nf_pad), lambda b: (b, 0, 0))),
        compiler_params=pltpu.CompilerParams(
            dimension_semantics=("parallel",),
            vmem_limit_bytes=48 * 1024 * 1024),
    )(yg, basis)
    mag = out[:, :, :nf]                             # [B, frames, n_freq]
    return mag.transpose(0, 2, 1)                    # [B, n_freq, frames]


# ----------------------------- model (forward) -----------------------------

def discriminator_p(x, period, pr):
    """HiFiGAN DiscriminatorP: x [B,1,T] -> (score [B, H*W], feat list of 6 NCHW maps)."""
    B, C, T = x.shape
    if T % period != 0:
        n_pad = period - (T % period)
        x = jnp.pad(x, ((0, 0), (0, 0), (0, n_pad)), mode="reflect")
        T = T + n_pad
    y = x.reshape(B, C, T // period, period)
    feat = []
    strides = [(3, 1)] * 4 + [(1, 1)]
    for li, (w, b) in enumerate(pr["convs"]):
        y = conv2d_pallas(y, w, b, stride=strides[li], padding=(2, 0), act=True)
        feat.append(y)
    w, b = pr["post"]
    y = conv2d_pallas(y, w, b, stride=(1, 1), padding=(1, 0), act=False)
    feat.append(y)
    return y.reshape(B, -1), feat


def spec_discriminator(x, fft_size, hop, win, pr):
    """SpecDiscriminator: x [B,1,T] -> (score [B, H*W], feat list of 6 NCHW maps)."""
    y = x[:, 0, :]                                   # squeeze(1); no-grad STFT in torch
    S = stft_mag_pallas(y, fft_size, hop, win)       # [B, F, frames]
    y = S[:, None, :, :]                             # unsqueeze(1) -> [B,1,F,frames]
    # TODO(synk): the PyTorch module applies spectral_norm here (truthy 'hann_window' arg);
    # with synthetic weights we use the raw weights (a per-layer scale-only difference).
    feat = []
    strides = [(1, 1), (1, 2), (1, 2), (1, 2), (1, 1)]
    pads = [(1, 4), (1, 4), (1, 4), (1, 4), (1, 1)]
    for li, (w, b) in enumerate(pr["convs"]):
        y = conv2d_pallas(y, w, b, stride=strides[li], padding=pads[li], act=True)
        feat.append(y)
    w, b = pr["out"]
    y = conv2d_pallas(y, w, b, stride=(1, 1), padding=(1, 1), act=False)
    feat.append(y)
    return y.reshape(y.shape[0], -1), feat


def univnet_discriminator_forward(x, params):
    """x: [B, 1, T] waveform. Returns (scores list[8], feats list[8] of list[6])."""
    scores, feats = [], []
    for period, pr in zip(PERIODS, params["mpd"]):
        s, f = discriminator_p(x, period, pr)
        scores.append(s)
        feats.append(f)
    for (fft_size, hop, win), pr in zip(zip(FFTS, HOPS, WINS), params["msd"]):
        s, f = spec_discriminator(x, fft_size, hop, win, pr)
        scores.append(s)
        feats.append(f)
    return scores, feats


# ----------------------------- deterministic params -----------------------------

def _conv_param(key, cout, cin, kh, kw):
    kw_, kb = jax.random.split(key)
    fan_in = cin * kh * kw
    w = jax.random.normal(kw_, (cout, cin, kh, kw), jnp.float32) / jnp.sqrt(float(fan_in))
    b = 0.01 * jax.random.normal(kb, (cout,), jnp.float32)
    return w, b


def init_params(key):
    # weight_norm at init is identity on the forward value, so raw weights are equivalent.
    params = {"mpd": [], "msd": []}
    for _ in PERIODS:
        convs = []
        for (cin, cout) in MPD_CHANNELS:
            key, sub = jax.random.split(key)
            convs.append(_conv_param(sub, cout, cin, 5, 1))
        key, sub = jax.random.split(key)
        post = _conv_param(sub, 1, 1024, 3, 1)
        params["mpd"].append({"convs": convs, "post": post})
    for _ in FFTS:
        convs = []
        for (cin, cout, kh, kw) in MSD_CONV_SPECS:
            key, sub = jax.random.split(key)
            convs.append(_conv_param(sub, cout, cin, kh, kw))
        key, sub = jax.random.split(key)
        out = _conv_param(sub, 1, 32, 3, 3)
        params["msd"].append({"convs": convs, "out": out})
    return params


if __name__ == "__main__":
    key = jax.random.PRNGKey(0)
    pkey, xkey = jax.random.split(key)
    params = init_params(pkey)

    B, T = 2, 1200                     # small waveform consistent with [B, 1, T] input
    x = 0.1 * jax.random.normal(xkey, (B, 1, T), jnp.float32)

    scores, feats = univnet_discriminator_forward(x, params)
    jax.block_until_ready((scores, feats))

    assert len(scores) == 8 and len(feats) == 8
    assert all(len(f) == 6 for f in feats)
    assert all(s.ndim == 2 and s.shape[0] == B for s in scores)
    print("KERNEL_OK")
</pallas_src>

<mosaic_0001>
module attributes {stable_mosaic.version = 11 : i64} {
  func.func @_mm_small_k_kernel(%arg0: i32, %arg1: memref<512x5xbf16, #tpu.memory_space<vmem>>, %arg2: memref<5x32xbf16, #tpu.memory_space<vmem>>, %arg3: memref<1x32xf32, #tpu.memory_space<vmem>>, %arg4: memref<512x32xf32, #tpu.memory_space<vmem>>) attributes {dimension_semantics = [#tpu.dimension_semantics<parallel>], iteration_bounds = array<i64: 2>, scalar_prefetch = 0 : i64, scratch_operands = 0 : i64, tpu.core_type = #tpu.core_type<tc>, window_params = [{transform_indices = @transform_0, window_bounds = array<i64: 512, 5>}, {pipeline_mode = #tpu.pipeline_mode<synchronous>, transform_indices = @transform_1, window_bounds = array<i64: 5, 32>}, {pipeline_mode = #tpu.pipeline_mode<synchronous>, transform_indices = @transform_2, window_bounds = array<i64: 1, 32>}, {transform_indices = @transform_3, window_bounds = array<i64: 512, 32>}]} {
    %c0 = arith.constant 0 : index
    %c0_0 = arith.constant 0 : index
    %0 = vector.load %arg1[%c0, %c0_0] : memref<512x5xbf16, #tpu.memory_space<vmem>>, vector<512x5xbf16>
    %c0_1 = arith.constant 0 : index
    %c0_2 = arith.constant 0 : index
    %1 = vector.load %arg2[%c0_1, %c0_2] : memref<5x32xbf16, #tpu.memory_space<vmem>>, vector<5x32xbf16>
    %cst = arith.constant dense<0.000000e+00> : vector<512x32xf32>
    %2 = tpu.matmul %0, %1, %cst {dimension_numbers = #tpu.dot_dimension_numbers<[1], [0], [0], [1], [0, 0, 1, 1], [], []>} : vector<512x5xbf16>, vector<5x32xbf16>, vector<512x32xf32> -> vector<512x32xf32>
    %c0_3 = arith.constant 0 : index
    %c0_4 = arith.constant 0 : index
    %3 = vector.load %arg3[%c0_3, %c0_4] : memref<1x32xf32, #tpu.memory_space<vmem>>, vector<1x32xf32>
    %4 = vector.broadcast %3 : vector<1x32xf32> to vector<512x32xf32>
    %5 = arith.addf %2, %4 : vector<512x32xf32>
    %cst_5 = arith.constant 0.000000e+00 : f32
    %6 = vector.broadcast %cst_5 : f32 to vector<512x32xf32>
    %7 = arith.cmpf oge, %5, %6 : vector<512x32xf32>
    %cst_6 = arith.constant 1.000000e-01 : f32
    %8 = vector.broadcast %cst_6 : f32 to vector<512x32xf32>
    %9 = arith.mulf %5, %8 : vector<512x32xf32>
    %10 = arith.select %7, %5, %9 : vector<512x32xi1>, vector<512x32xf32>
    %c0_7 = arith.constant 0 : index
    %c0_8 = arith.constant 0 : index
    %11 = vector.load %arg4[%c0_7, %c0_8] : memref<512x32xf32, #tpu.memory_space<vmem>>, vector<512x32xf32>
    tpu.vector_store %arg4[%c0_7, %c0_8], %10 {strides = array<i32>} : memref<512x32xf32, #tpu.memory_space<vmem>>, vector<512x32xf32>,
    return
  }
  func.func @transform_0(%arg0: i32) -> (i32, i32) {
    %c0_i32 = arith.constant 0 : i32
    %c0_i32_0 = arith.constant 0 : i32
    return %arg0, %c0_i32 : i32, i32
  }
  func.func @transform_1(%arg0: i32) -> (i32, i32) {
    %c0_i32 = arith.constant 0 : i32
    %c0_i32_0 = arith.constant 0 : i32
    %c0_i32_1 = arith.constant 0 : i32
    return %c0_i32, %c0_i32_0 : i32, i32
  }
  func.func @transform_2(%arg0: i32) -> (i32, i32) {
    %c0_i32 = arith.constant 0 : i32
    %c0_i32_0 = arith.constant 0 : i32
    %c0_i32_1 = arith.constant 0 : i32
    return %c0_i32, %c0_i32_0 : i32, i32
  }
  func.func @transform_3(%arg0: i32) -> (i32, i32) {
    %c0_i32 = arith.constant 0 : i32
    %c0_i32_0 = arith.constant 0 : i32
    return %arg0, %c0_i32 : i32, i32
  }
}

</mosaic_0001>

<llo_original>
// kernel: tpu_custom_call.1
$region0: #{tpu_custom_call.1}
  #allocation0 [shape = 'u32[]', space=smem, size = 0x4, offset = 0x4, fixed_abs, tag = 'smem constant byte address 0x4 - core index']
  #allocation1 [shape = 'u32[72,128]{1,0:T(1,128)}', space=vmem, size = 0x9000, scoped, tag = 'internal scratch']
  %s0 = inlined_call_operand.vmem [shape: bf16[1024,5], index: 0, kind: input, shape index: {}]
  %s1 = inlined_call_operand.vmem [shape: bf16[5,32], index: 1, kind: input, shape index: {}]
  %s2 = inlined_call_operand.vmem [shape: f32[1,32], index: 2, kind: input, shape index: {}]
  %s3 = inlined_call_operand.vmem [shape: f32[1024,32], index: 3, kind: output, shape index: {}]
  %s4 = sld [smem:[#allocation0]]
  $region45: #{tpu_custom_call.1} parent=0
    _
  %s6 = ssub.s32 1, %s4
  %s7 = scalar_select 0, %s6, %s4
  loop: start=0, step=1, limit=4
  $region2: #{tpu_custom_call.1} parent=0 // loop_pre_header
    _
  $region3: #{tpu_custom_call.1} parent=0 // loop_header
    %s9 = sphi 0, %s13
    %p10 = scmp.ge.s32.totalorder %s9, 4
    %s19 = sphi 0, %s21
    %s22 = sphi 0, %s19
    %s23 = sphi 0, %s22
    %s39 = sphi 0, %s23
    %s43 = sphi 0, %s43
    %s45 = sphi 0, %s43
    %s46 = sphi 0, %s45
    %s60 = sphi 0, %s46
    %s64 = sphi 0, %s64
    %s66 = sphi 0, %s64
    %s67 = sphi 0, %s66
    %s81 = sphi 0, %s67
    %s87 = sphi 0, %s89
    %s90 = sphi 0, %s87
    %s91 = sphi 0, %s90
    %s107 = sphi 0, %s91
  $region4: #{tpu_custom_call.1} parent=0 // loop_header_branch
    %12 = sbr.rel (%p10) target = $region8
  $region5: #{tpu_custom_call.1} parent=0 // loop_body
    %s14 = ssub.s32 %s9, 1
    %s15 = ssub.s32 %s9, 2
    %s16 = sadd.s32 %s9, 1
    %s17 = ssub.s32 %s9, %s16
    %p18 = scmp.eq.s32.totalorder %s17, 0
    %s20 = sadd.s32 %s19, 1
    %s21 = scalar_select %p18, %s19, %s20
    %p24 = pneg %p18
    %p25 = scmp.eq.s32.totalorder %s9, 1
    %p26 = por %p24, %p25
    %p27 = scmp.ne.s32.totalorder %s19, %s22
    %p28 = scmp.eq.s32.totalorder %s9, 0
    %p29 = por %p27, %p28
    %p30 = scmp.ne.s32.totalorder %s19, %s22
    %p31 = scmp.eq.s32.totalorder %s14, 1
    %p32 = por %p30, %p31
    %p33 = scmp.ne.s32.totalorder %s22, %s23
    %p34 = scmp.eq.s32.totalorder %s14, 0
    %p35 = por %p33, %p34
    %p36 = scmp.ne.s32.totalorder %s22, %s23
    %p37 = scmp.eq.s32.totalorder %s15, 1
    %p38 = por %p36, %p37
    %p40 = scmp.ne.s32.totalorder %s23, %s39
    %p41 = scmp.eq.s32.totalorder %s15, 0
    %p42 = por %p40, %p41
    %s44 = sadd.s32 %s43, 1
    %p47 = scmp.eq.s32.totalorder %s9, 1
    %p48 = scmp.ne.s32.totalorder %s43, %s45
    %p49 = scmp.eq.s32.totalorder %s9, 0
    %p50 = por %p48, %p49
    %p51 = scmp.ne.s32.totalorder %s43, %s45
    %p52 = scmp.eq.s32.totalorder %s14, 1
    %p53 = por %p51, %p52
    %p54 = scmp.ne.s32.totalorder %s45, %s46
    %p55 = scmp.eq.s32.totalorder %s14, 0
    %p56 = por %p54, %p55
    %p57 = scmp.ne.s32.totalorder %s45, %s46
    %p58 = scmp.eq.s32.totalorder %s15, 1
    %p59 = por %p57, %p58
    %p61 = scmp.ne.s32.totalorder %s46, %s60
    %p62 = scmp.eq.s32.totalorder %s15, 0
    %p63 = por %p61, %p62
    %s65 = sadd.s32 %s64, 1
    %p68 = scmp.eq.s32.totalorder %s9, 1
    %p69 = scmp.ne.s32.totalorder %s64, %s66
    %p70 = scmp.eq.s32.totalorder %s9, 0
    %p71 = por %p69, %p70
    %p72 = scmp.ne.s32.totalorder %s64, %s66
    %p73 = scmp.eq.s32.totalorder %s14, 1
    %p74 = por %p72, %p73
    %p75 = scmp.ne.s32.totalorder %s66, %s67
    %p76 = scmp.eq.s32.totalorder %s14, 0
    %p77 = por %p75, %p76
    %p78 = scmp.ne.s32.totalorder %s66, %s67
    %p79 = scmp.eq.s32.totalorder %s15, 1
    %p80 = por %p78, %p79
    %p82 = scmp.ne.s32.totalorder %s67, %s81
    %p83 = scmp.eq.s32.totalorder %s15, 0
    %p84 = por %p82, %p83
    %s85 = ssub.s32 %s9, %s16
    %p86 = scmp.eq.s32.totalorder %s85, 0
    %s88 = sadd.s32 %s87, 1
    %s89 = scalar_select %p86, %s87, %s88
    %p92 = pneg %p86
    %p93 = scmp.eq.s32.totalorder %s9, 1
    %p94 = por %p92, %p93
    %p95 = scmp.ne.s32.totalorder %s87, %s90
    %p96 = scmp.eq.s32.totalorder %s9, 0
    %p97 = por %p95, %p96
    %p98 = scmp.ne.s32.totalorder %s87, %s90
    %p99 = scmp.eq.s32.totalorder %s14, 1
    %p100 = por %p98, %p99
    %p101 = scmp.ne.s32.totalorder %s90, %s91
    %p102 = scmp.eq.s32.totalorder %s14, 0
    %p103 = por %p101, %p102
    %p104 = scmp.ne.s32.totalorder %s90, %s91
    %p105 = scmp.eq.s32.totalorder %s15, 1
    %p106 = por %p104, %p105
    %p108 = scmp.ne.s32.totalorder %s91, %s107
    %p109 = scmp.eq.s32.totalorder %s15, 0
    %p110 = por %p108, %p109
    %p111 = scmp.le.s32.totalorder 1, %s9
    %p112 = scmp.lt.s32.totalorder %s9, 3
    %p113 = pnand %p111, %p112
    %p114 = pneg %p113
    // Predicated region
    $region9: #{tpu_custom_call.1} parent=5 // pred_check
      _
    $region10: #{tpu_custom_call.1} parent=5 // pred_check_branch
      %116 = sbr.rel (%p113) target = $region12
    $region11: #{tpu_custom_call.1} parent=5 // pred_region
      %s117 = ssub.s32 %s9, 1
      // Predicated region
      $region13: #{tpu_custom_call.1} parent=11 // pred_check
        %p118 = pneg %p56
      $region14: #{tpu_custom_call.1} parent=11 // pred_check_branch
        %120 = sbr.rel (%p118) target = $region16
      $region15: #{tpu_custom_call.1} parent=11 // pred_region
        _
      $region16: #{tpu_custom_call.1} parent=11 // pred_fallthru
        _
      // Predicated region
      $region17: #{tpu_custom_call.1} parent=11 // pred_check
        %p121 = pneg %p77
      $region18: #{tpu_custom_call.1} parent=11 // pred_check_branch
        %123 = sbr.rel (%p121) target = $region20
      $region19: #{tpu_custom_call.1} parent=11 // pred_region
        _
      $region20: #{tpu_custom_call.1} parent=11 // pred_fallthru
        _
    $region12: #{tpu_custom_call.1} parent=5 // pred_fallthru
      _
    %p124 = scmp.lt.s32.totalorder %s9, 2
    // Predicated region
    $region21: #{tpu_custom_call.1} parent=5 // pred_check
      %p125 = pneg %p124
    $region22: #{tpu_custom_call.1} parent=5 // pred_check_branch
      %127 = sbr.rel (%p125) target = $region24
    $region23: #{tpu_custom_call.1} parent=5 // pred_region
      // Predicated region
      $region25: #{tpu_custom_call.1} parent=23 // pred_check
        %p128 = pneg %p29
      $region26: #{tpu_custom_call.1} parent=23 // pred_check_branch
        %130 = sbr.rel (%p128) target = $region28
      $region27: #{tpu_custom_call.1} parent=23 // pred_region
        %s131 = smul.u32 64, %s9
        %p132 = scmp.lt.s32.totalorder %s131, 127
        %s133 = scalar_select %p132, %s131, 127
        %s134 = smul.addr %s133, 4
        %s135 = scalar_lea.vmem %s0, %s134
        %s136 = smul.u32 64, %s9
      $region28: #{tpu_custom_call.1} parent=23 // pred_fallthru
        _
    $region24: #{tpu_custom_call.1} parent=5 // pred_fallthru
      _
    %p137 = scmp.le.s32.totalorder 1, %s9
    %p138 = scmp.lt.s32.totalorder %s9, 3
    %p139 = pnand %p137, %p138
    %p140 = pneg %p139
    // Predicated region
    $region29: #{tpu_custom_call.1} parent=5 // pred_check
      _
    $region30: #{tpu_custom_call.1} parent=5 // pred_check_branch
      %142 = sbr.rel (%p139) target = $region32
    $region31: #{tpu_custom_call.1} parent=5 // pred_region
      %s143 = ssub.s32 %s9, 1
      %s144 = smul.u32 64, %s14
      %p145 = scmp.lt.s32.totalorder %s144, 127
      %s146 = scalar_select %p145, %s144, 127
      %s147 = smul.addr %s146, 4
      %s148 = scalar_lea.vmem %s0, %s147
      %p149 = pneg %p35
      %p150 = pneg %p32
      %p151 = pneg %p56
      %p152 = pneg %p53
      %p153 = pneg %p77
      %p154 = pneg %p74
      %p155 = pneg %p103
      %p156 = pneg %p100
      %s157 = smul.u32 64, %s14
      %p158 = scmp.lt.s32.totalorder %s157, 127
      %s159 = scalar_select %p158, %s157, 127
      %s160 = smul.addr %s159, 8
      %s161 = scalar_lea.vmem %s3, %s160
      %s162 = smul.u32 64, %s14
      %p163 = scmp.lt.s32.totalorder %s162, 127
      %s164 = scalar_select %p163, %s162, 127
      %s165 = smul.addr %s164, 4
      %s166 = scalar_lea.vmem %s0, %s165
      %s167 = smul.u32 64, %s14
      %s168 = smul.u32 64, %s14
      %p169 = scmp.lt.s32.totalorder %s168, 127
      %s170 = scalar_select %p169, %s168, 127
      %s171 = smul.addr %s170, 8
      %s172 = scalar_lea.vmem %s3, %s171
      %s173 = smul.u32 64, %s14
      %v175 = vld [vmem:[%s166] sm:$0xf]
      %v176 = vld [vmem:[%s166 + $0x4] sm:$0xf]
      %v177 = vld [vmem:[%s166 + $0x8] sm:$0xf]
      %v178 = vld [vmem:[%s166 + $0xc] sm:$0xf]
      %v179 = vld [vmem:[%s166 + $0x10] sm:$0xf]
      %v180 = vld [vmem:[%s166 + $0x14] sm:$0xf]
      %v181 = vld [vmem:[%s166 + $0x18] sm:$0xf]
      %v182 = vld [vmem:[%s166 + $0x1c] sm:$0xf]
      %v183 = vld [vmem:[%s166 + $0x20] sm:$0xf]
      %v184 = vld [vmem:[%s166 + $0x24] sm:$0xf]
      %v185 = vld [vmem:[%s166 + $0x28] sm:$0xf]
      %v186 = vld [vmem:[%s166 + $0x2c] sm:$0xf]
      %v187 = vld [vmem:[%s166 + $0x30] sm:$0xf]
      %v188 = vld [vmem:[%s166 + $0x34] sm:$0xf]
      %v189 = vld [vmem:[%s166 + $0x38] sm:$0xf]
      %v190 = vld [vmem:[%s166 + $0x3c] sm:$0xf]
      %v191 = vld [vmem:[%s166 + $0x40] sm:$0xf]
      %v192 = vld [vmem:[%s166 + $0x44] sm:$0xf]
      %v193 = vld [vmem:[%s166 + $0x48] sm:$0xf]
      %v194 = vld [vmem:[%s166 + $0x4c] sm:$0xf]
      %v195 = vld [vmem:[%s166 + $0x50] sm:$0xf]
      %v196 = vld [vmem:[%s166 + $0x54] sm:$0xf]
      %v197 = vld [vmem:[%s166 + $0x58] sm:$0xf]
      %v198 = vld [vmem:[%s166 + $0x5c] sm:$0xf]
      %v199 = vld [vmem:[%s166 + $0x60] sm:$0xf]
      %v200 = vld [vmem:[%s166 + $0x64] sm:$0xf]
      %v201 = vld [vmem:[%s166 + $0x68] sm:$0xf]
      %v202 = vld [vmem:[%s166 + $0x6c] sm:$0xf]
      %v203 = vld [vmem:[%s166 + $0x70] sm:$0xf]
      %v204 = vld [vmem:[%s166 + $0x74] sm:$0xf]
      %v205 = vld [vmem:[%s166 + $0x78] sm:$0xf]
      %v206 = vld [vmem:[%s166 + $0x7c] sm:$0xf]
      %v207 = vld [vmem:[%s166 + $0x80] sm:$0xf]
      %v208 = vld [vmem:[%s166 + $0x84] sm:$0xf]
      %v209 = vld [vmem:[%s166 + $0x88] sm:$0xf]
      %v210 = vld [vmem:[%s166 + $0x8c] sm:$0xf]
      %v211 = vld [vmem:[%s166 + $0x90] sm:$0xf]
      %v212 = vld [vmem:[%s166 + $0x94] sm:$0xf]
      %v213 = vld [vmem:[%s166 + $0x98] sm:$0xf]
      %v214 = vld [vmem:[%s166 + $0x9c] sm:$0xf]
      %v215 = vld [vmem:[%s166 + $0xa0] sm:$0xf]
      %v216 = vld [vmem:[%s166 + $0xa4] sm:$0xf]
      %v217 = vld [vmem:[%s166 + $0xa8] sm:$0xf]
      %v218 = vld [vmem:[%s166 + $0xac] sm:$0xf]
      %v219 = vld [vmem:[%s166 + $0xb0] sm:$0xf]
      %v220 = vld [vmem:[%s166 + $0xb4] sm:$0xf]
      %v221 = vld [vmem:[%s166 + $0xb8] sm:$0xf]
      %v222 = vld [vmem:[%s166 + $0xbc] sm:$0xf]
      %v223 = vld [vmem:[%s166 + $0xc0] sm:$0xf]
      %v224 = vld [vmem:[%s166 + $0xc4] sm:$0xf]
      %v225 = vld [vmem:[%s166 + $0xc8] sm:$0xf]
      %v226 = vld [vmem:[%s166 + $0xcc] sm:$0xf]
      %v227 = vld [vmem:[%s166 + $0xd0] sm:$0xf]
      %v228 = vld [vmem:[%s166 + $0xd4] sm:$0xf]
      %v229 = vld [vmem:[%s166 + $0xd8] sm:$0xf]
      %v230 = vld [vmem:[%s166 + $0xdc] sm:$0xf]
      %v231 = vld [vmem:[%s166 + $0xe0] sm:$0xf]
      %v232 = vld [vmem:[%s166 + $0xe4] sm:$0xf]
      %v233 = vld [vmem:[%s166 + $0xe8] sm:$0xf]
      %v234 = vld [vmem:[%s166 + $0xec] sm:$0xf]
      %v235 = vld [vmem:[%s166 + $0xf0] sm:$0xf]
      %v236 = vld [vmem:[%s166 + $0xf4] sm:$0xf]
      %v237 = vld [vmem:[%s166 + $0xf8] sm:$0xf]
      %v238 = vld [vmem:[%s166 + $0xfc] sm:$0xf]
      %v239 = vld [vmem:[%s1] sm:$0x7]
      %v240 = vld [vmem:[%s2] sm:$0x1]
      %v242 = vperm.slane %v240, 0
      %v308 = vunpack.c.l.b16 %v175
      %v309 = vunpack.c.l.b16 %v176
      %v310 = vunpack.c.l.b16 %v177
      %v311 = vunpack.c.l.b16 %v178
      %v312 = vunpack.c.l.b16 %v179
      %v313 = vunpack.c.l.b16 %v180
      %v314 = vunpack.c.l.b16 %v181
      %v315 = vunpack.c.l.b16 %v182
      %v316 = vunpack.c.l.b16 %v183
      %v317 = vunpack.c.l.b16 %v184
      %v318 = vunpack.c.l.b16 %v185
      %v319 = vunpack.c.l.b16 %v186
      %v320 = vunpack.c.l.b16 %v187
      %v321 = vunpack.c.l.b16 %v188
      %v322 = vunpack.c.l.b16 %v189
      %v323 = vunpack.c.l.b16 %v190
      %v324 = vunpack.c.l.b16 %v191
      %v325 = vunpack.c.l.b16 %v192
      %v326 = vunpack.c.l.b16 %v193
      %v327 = vunpack.c.l.b16 %v194
      %v328 = vunpack.c.l.b16 %v195
      %v329 = vunpack.c.l.b16 %v196
      %v330 = vunpack.c.l.b16 %v197
      %v331 = vunpack.c.l.b16 %v198
      %v332 = vunpack.c.l.b16 %v199
      %v333 = vunpack.c.l.b16 %v200
      %v334 = vunpack.c.l.b16 %v201
      %v335 = vunpack.c.l.b16 %v202
      %v336 = vunpack.c.l.b16 %v203
      %v337 = vunpack.c.l.b16 %v204
      %v338 = vunpack.c.l.b16 %v205
      %v339 = vunpack.c.l.b16 %v206
      %v340 = vunpack.c.l.b16 %v207
      %v341 = vunpack.c.l.b16 %v208
      %v342 = vunpack.c.l.b16 %v209
      %v343 = vunpack.c.l.b16 %v210
      %v344 = vunpack.c.l.b16 %v211
      %v345 = vunpack.c.l.b16 %v212
      %v346 = vunpack.c.l.b16 %v213
      %v347 = vunpack.c.l.b16 %v214
      %v348 = vunpack.c.l.b16 %v215
      %v349 = vunpack.c.l.b16 %v216
      %v350 = vunpack.c.l.b16 %v217
      %v351 = vunpack.c.l.b16 %v218
      %v352 = vunpack.c.l.b16 %v219
      %v353 = vunpack.c.l.b16 %v220
      %v354 = vunpack.c.l.b16 %v221
      %v355 = vunpack.c.l.b16 %v222
      %v356 = vunpack.c.l.b16 %v223
      %v357 = vunpack.c.l.b16 %v224
      %v358 = vunpack.c.l.b16 %v225
      %v359 = vunpack.c.l.b16 %v226
      %v360 = vunpack.c.l.b16 %v227
      %v361 = vunpack.c.l.b16 %v228
      %v362 = vunpack.c.l.b16 %v229
      %v363 = vunpack.c.l.b16 %v230
      %v364 = vunpack.c.l.b16 %v231
      %v365 = vunpack.c.l.b16 %v232
      %v366 = vunpack.c.l.b16 %v233
      %v367 = vunpack.c.l.b16 %v234
      %v368 = vunpack.c.l.b16 %v235
      %v369 = vunpack.c.l.b16 %v236
      %v370 = vunpack.c.l.b16 %v237
      %v371 = vunpack.c.l.b16 %v238
      %v372 = vpack.c.b16 %v309, %v308
      %v373 = vpack.c.b16 %v311, %v310
      %v374 = vpack.c.b16 %v313, %v312
      %v375 = vpack.c.b16 %v315, %v314
      %v376 = vpack.c.b16 %v317, %v316
      %v377 = vpack.c.b16 %v319, %v318
      %v378 = vpack.c.b16 %v321, %v320
      %v379 = vpack.c.b16 %v323, %v322
      %v380 = vpack.c.b16 %v325, %v324
      %v381 = vpack.c.b16 %v327, %v326
      %v382 = vpack.c.b16 %v329, %v328
      %v383 = vpack.c.b16 %v331, %v330
      %v384 = vpack.c.b16 %v333, %v332
      %v385 = vpack.c.b16 %v335, %v334
      %v386 = vpack.c.b16 %v337, %v336
      %v387 = vpack.c.b16 %v339, %v338
      %v388 = vpack.c.b16 %v341, %v340
      %v389 = vpack.c.b16 %v343, %v342
      %v390 = vpack.c.b16 %v345, %v344
      %v391 = vpack.c.b16 %v347, %v346
      %v392 = vpack.c.b16 %v349, %v348
      %v393 = vpack.c.b16 %v351, %v350
      %v394 = vpack.c.b16 %v353, %v352
      %v395 = vpack.c.b16 %v355, %v354
      %v396 = vpack.c.b16 %v357, %v356
      %v397 = vpack.c.b16 %v359, %v358
      %v398 = vpack.c.b16 %v361, %v360
      %v399 = vpack.c.b16 %v363, %v362
      %v400 = vpack.c.b16 %v365, %v364
      %v401 = vpack.c.b16 %v367, %v366
      %v402 = vpack.c.b16 %v369, %v368
      %v403 = vpack.c.b16 %v371, %v370
      %vm404 = vcmask 39936
      %v406 = vsel %vm404, %v372, 0
      %v409 = vsel %vm404, %v373, 0
      %v412 = vsel %vm404, %v374, 0
      %v415 = vsel %vm404, %v375, 0
      %v418 = vsel %vm404, %v376, 0
      %v421 = vsel %vm404, %v377, 0
      %v424 = vsel %vm404, %v378, 0
      %v427 = vsel %vm404, %v379, 0
      %v430 = vsel %vm404, %v380, 0
      %v433 = vsel %vm404, %v381, 0
      %v436 = vsel %vm404, %v382, 0
      %v439 = vsel %vm404, %v383, 0
      %v442 = vsel %vm404, %v384, 0
      %v445 = vsel %vm404, %v385, 0
      %v448 = vsel %vm404, %v386, 0
      %v451 = vsel %vm404, %v387, 0
      %v454 = vsel %vm404, %v388, 0
      %v457 = vsel %vm404, %v389, 0
      %v460 = vsel %vm404, %v390, 0
      %v463 = vsel %vm404, %v391, 0
      %v466 = vsel %vm404, %v392, 0
      %v469 = vsel %vm404, %v393, 0
      %v472 = vsel %vm404, %v394, 0
      %v475 = vsel %vm404, %v395, 0
      %v478 = vsel %vm404, %v396, 0
      %v481 = vsel %vm404, %v397, 0
      %v484 = vsel %vm404, %v398, 0
      %v487 = vsel %vm404, %v399, 0
      %v490 = vsel %vm404, %v400, 0
      %v493 = vsel %vm404, %v401, 0
      %v496 = vsel %vm404, %v402, 0
      %v499 = vsel %vm404, %v403, 0
      %vm501 = vcmask 1041408
      %vm502 = vcmask 1042432
      %v503 = vsel %vm501, 4294967295, 65535
      %v504 = vsel %vm502, %v503, 0
      %v506 = vand.u32 %v239, %v504
      %508 = vmatpush.bf16.msra.mxu0 0
      %509 = vmatpush.bf16.msra.mxu0 0
      %510 = vmatpush.bf16.msra.mxu0 0
      %511 = vmatpush.bf16.msra.mxu0 0
      %512 = vmatpush.bf16.msra.mxu0 0
      %513 = vmatpush.bf16.msra.mxu0 0
      %514 = vmatpush.bf16.msra.mxu0 0
      %515 = vmatpush.bf16.msra.mxu0 %v506
      %516 = vmatmul.bf16.gmra.mxu0 %v406
      %v517 = vpop.f32.mrf.mxu0
      %v518 = vadd.f32 %v242, %v517
      %v519 = vpop.f32.mrf.mxu0
      %v520 = vadd.f32 %v242, %v519
      %521 = vmatmul.bf16.gmra.mxu0 %v409
      %v522 = vpop.f32.mrf.mxu0
      %v523 = vadd.f32 %v242, %v522
      %v524 = vpop.f32.mrf.mxu0
      %v525 = vadd.f32 %v242, %v524
      %526 = vmatmul.bf16.gmra.mxu0 %v412
      %v527 = vpop.f32.mrf.mxu0
      %v528 = vadd.f32 %v242, %v527
      %v529 = vpop.f32.mrf.mxu0
      %v530 = vadd.f32 %v242, %v529
      %531 = vmatmul.bf16.gmra.mxu0 %v415
      %v532 = vpop.f32.mrf.mxu0
      %v533 = vadd.f32 %v242, %v532
      %v534 = vpop.f32.mrf.mxu0
      %v535 = vadd.f32 %v242, %v534
      %536 = vmatmul.bf16.gmra.mxu0 %v418
      %v537 = vpop.f32.mrf.mxu0
      %v538 = vadd.f32 %v242, %v537
      %v539 = vpop.f32.mrf.mxu0
      %v540 = vadd.f32 %v242, %v539
      %541 = vmatmul.bf16.gmra.mxu0 %v421
      %v542 = vpop.f32.mrf.mxu0
      %v543 = vadd.f32 %v242, %v542
      %v544 = vpop.f32.mrf.mxu0
      %v545 = vadd.f32 %v242, %v544
      %546 = vmatmul.bf16.gmra.mxu0 %v424
      %v547 = vpop.f32.mrf.mxu0
      %v548 = vadd.f32 %v242, %v547
      %v549 = vpop.f32.mrf.mxu0
      %v550 = vadd.f32 %v242, %v549
      %551 = vmatmul.bf16.gmra.mxu0 %v427
      %v552 = vpop.f32.mrf.mxu0
      %v553 = vadd.f32 %v242, %v552
      %v554 = vpop.f32.mrf.mxu0
      %v555 = vadd.f32 %v242, %v554
      %556 = vmatmul.bf16.gmra.mxu0 %v430
      %v557 = vpop.f32.mrf.mxu0
      %v558 = vadd.f32 %v242, %v557
      %v559 = vpop.f32.mrf.mxu0
      %v560 = vadd.f32 %v242, %v559
      %561 = vmatmul.bf16.gmra.mxu0 %v433
      %v562 = vpop.f32.mrf.mxu0
      %v563 = vadd.f32 %v242, %v562
      %v564 = vpop.f32.mrf.mxu0
      %v565 = vadd.f32 %v242, %v564
      %566 = vmatmul.bf16.gmra.mxu0 %v436
      %v567 = vpop.f32.mrf.mxu0
      %v568 = vadd.f32 %v242, %v567
      %v569 = vpop.f32.mrf.mxu0
      %v570 = vadd.f32 %v242, %v569
      %571 = vmatmul.bf16.gmra.mxu0 %v439
      %v572 = vpop.f32.mrf.mxu0
      %v573 = vadd.f32 %v242, %v572
      %v574 = vpop.f32.mrf.mxu0
      %v575 = vadd.f32 %v242, %v574
      %576 = vmatmul.bf16.gmra.mxu0 %v442
      %v577 = vpop.f32.mrf.mxu0
      %v578 = vadd.f32 %v242, %v577
      %v579 = vpop.f32.mrf.mxu0
      %v580 = vadd.f32 %v242, %v579
      %581 = vmatmul.bf16.gmra.mxu0 %v445
      %v582 = vpop.f32.mrf.mxu0
      %v583 = vadd.f32 %v242, %v582
      %v584 = vpop.f32.mrf.mxu0
      %v585 = vadd.f32 %v242, %v584
      %586 = vmatmul.bf16.gmra.mxu0 %v448
      %v587 = vpop.f32.mrf.mxu0
      %v588 = vadd.f32 %v242, %v587
      %v589 = vpop.f32.mrf.mxu0
      %v590 = vadd.f32 %v242, %v589
      %591 = vmatmul.bf16.gmra.mxu0 %v451
      %v592 = vpop.f32.mrf.mxu0
      %v593 = vadd.f32 %v242, %v592
      %v594 = vpop.f32.mrf.mxu0
      %v595 = vadd.f32 %v242, %v594
      %596 = vmatmul.bf16.gmra.mxu0 %v454
      %v597 = vpop.f32.mrf.mxu0
      %v598 = vadd.f32 %v242, %v597
      %v599 = vpop.f32.mrf.mxu0
      %v600 = vadd.f32 %v242, %v599
      %601 = vmatmul.bf16.gmra.mxu0 %v457
      %v602 = vpop.f32.mrf.mxu0
      %v603 = vadd.f32 %v242, %v602
      %v604 = vpop.f32.mrf.mxu0
      %v605 = vadd.f32 %v242, %v604
      %606 = vmatmul.bf16.gmra.mxu0 %v460
      %v607 = vpop.f32.mrf.mxu0
      %v608 = vadd.f32 %v242, %v607
      %v609 = vpop.f32.mrf.mxu0
      %v610 = vadd.f32 %v242, %v609
      %611 = vmatmul.bf16.gmra.mxu0 %v463
      %v612 = vpop.f32.mrf.mxu0
      %v613 = vadd.f32 %v242, %v612
      %v614 = vpop.f32.mrf.mxu0
      %v615 = vadd.f32 %v242, %v614
      %616 = vmatmul.bf16.gmra.mxu0 %v466
      %v617 = vpop.f32.mrf.mxu0
      %v618 = vadd.f32 %v242, %v617
      %v619 = vpop.f32.mrf.mxu0
      %v620 = vadd.f32 %v242, %v619
      %621 = vmatmul.bf16.gmra.mxu0 %v469
      %v622 = vpop.f32.mrf.mxu0
      %v623 = vadd.f32 %v242, %v622
      %v624 = vpop.f32.mrf.mxu0
      %v625 = vadd.f32 %v242, %v624
      %626 = vmatmul.bf16.gmra.mxu0 %v472
      %v627 = vpop.f32.mrf.mxu0
      %v628 = vadd.f32 %v242, %v627
      %v629 = vpop.f32.mrf.mxu0
      %v630 = vadd.f32 %v242, %v629
      %631 = vmatmul.bf16.gmra.mxu0 %v475
      %v632 = vpop.f32.mrf.mxu0
      %v633 = vadd.f32 %v242, %v632
      %v634 = vpop.f32.mrf.mxu0
      %v635 = vadd.f32 %v242, %v634
      %636 = vmatmul.bf16.gmra.mxu0 %v478
      %v637 = vpop.f32.mrf.mxu0
      %v638 = vadd.f32 %v242, %v637
      %v639 = vpop.f32.mrf.mxu0
      %v640 = vadd.f32 %v242, %v639
      %641 = vmatmul.bf16.gmra.mxu0 %v481
      %v642 = vpop.f32.mrf.mxu0
      %v643 = vadd.f32 %v242, %v642
      %v644 = vpop.f32.mrf.mxu0
      %v645 = vadd.f32 %v242, %v644
      %646 = vmatmul.bf16.gmra.mxu0 %v484
      %v647 = vpop.f32.mrf.mxu0
      %v648 = vadd.f32 %v242, %v647
      %v649 = vpop.f32.mrf.mxu0
      %v650 = vadd.f32 %v242, %v649
      %651 = vmatmul.bf16.gmra.mxu0 %v487
      %v652 = vpop.f32.mrf.mxu0
      %v653 = vadd.f32 %v242, %v652
      %v654 = vpop.f32.mrf.mxu0
      %v655 = vadd.f32 %v242, %v654
      %656 = vmatmul.bf16.gmra.mxu0 %v490
      %v657 = vpop.f32.mrf.mxu0
      %v658 = vadd.f32 %v242, %v657
      %v659 = vpop.f32.mrf.mxu0
      %v660 = vadd.f32 %v242, %v659
      %661 = vmatmul.bf16.gmra.mxu0 %v493
      %v662 = vpop.f32.mrf.mxu0
      %v663 = vadd.f32 %v242, %v662
      %v664 = vpop.f32.mrf.mxu0
      %v665 = vadd.f32 %v242, %v664
      %666 = vmatmul.bf16.gmra.mxu0 %v496
      %v667 = vpop.f32.mrf.mxu0
      %v668 = vadd.f32 %v242, %v667
      %v669 = vpop.f32.mrf.mxu0
      %v670 = vadd.f32 %v242, %v669
      %671 = vmatmul.bf16.gmra.mxu0 %v499
      %v672 = vpop.f32.mrf.mxu0
      %v673 = vadd.f32 %v242, %v672
      %v674 = vpop.f32.mrf.mxu0
      %v675 = vadd.f32 %v242, %v674
      %676 = vdwg.mxu0
      %vm677 = vcmp.ge.f32.partialorder %v518, 0.0
      %vm678 = vcmp.ge.f32.partialorder %v520, 0.0
      %vm679 = vcmp.ge.f32.partialorder %v523, 0.0
      %vm680 = vcmp.ge.f32.partialorder %v525, 0.0
      %vm681 = vcmp.ge.f32.partialorder %v528, 0.0
      %vm682 = vcmp.ge.f32.partialorder %v530, 0.0
      %vm683 = vcmp.ge.f32.partialorder %v533, 0.0
      %vm684 = vcmp.ge.f32.partialorder %v535, 0.0
      %vm685 = vcmp.ge.f32.partialorder %v538, 0.0
      %vm686 = vcmp.ge.f32.partialorder %v540, 0.0
      %vm687 = vcmp.ge.f32.partialorder %v543, 0.0
      %vm688 = vcmp.ge.f32.partialorder %v545, 0.0
      %vm689 = vcmp.ge.f32.partialorder %v548, 0.0
      %vm690 = vcmp.ge.f32.partialorder %v550, 0.0
      %vm691 = vcmp.ge.f32.partialorder %v553, 0.0
      %vm692 = vcmp.ge.f32.partialorder %v555, 0.0
      %vm693 = vcmp.ge.f32.partialorder %v558, 0.0
      %vm694 = vcmp.ge.f32.partialorder %v560, 0.0
      %vm695 = vcmp.ge.f32.partialorder %v563, 0.0
      %vm696 = vcmp.ge.f32.partialorder %v565, 0.0
      %vm697 = vcmp.ge.f32.partialorder %v568, 0.0
      %vm698 = vcmp.ge.f32.partialorder %v570, 0.0
      %vm699 = vcmp.ge.f32.partialorder %v573, 0.0
      %vm700 = vcmp.ge.f32.partialorder %v575, 0.0
      %vm701 = vcmp.ge.f32.partialorder %v578, 0.0
      %vm702 = vcmp.ge.f32.partialorder %v580, 0.0
      %vm703 = vcmp.ge.f32.partialorder %v583, 0.0
      %vm704 = vcmp.ge.f32.partialorder %v585, 0.0
      %vm705 = vcmp.ge.f32.partialorder %v588, 0.0
      %vm706 = vcmp.ge.f32.partialorder %v590, 0.0
      %vm707 = vcmp.ge.f32.partialorder %v593, 0.0
      %vm708 = vcmp.ge.f32.partialorder %v595, 0.0
      %vm709 = vcmp.ge.f32.partialorder %v598, 0.0
      %vm710 = vcmp.ge.f32.partialorder %v600, 0.0
      %vm711 = vcmp.ge.f32.partialorder %v603, 0.0
      %vm712 = vcmp.ge.f32.partialorder %v605, 0.0
      %vm713 = vcmp.ge.f32.partialorder %v608, 0.0
      %vm714 = vcmp.ge.f32.partialorder %v610, 0.0
      %vm715 = vcmp.ge.f32.partialorder %v613, 0.0
      %vm716 = vcmp.ge.f32.partialorder %v615, 0.0
      %vm717 = vcmp.ge.f32.partialorder %v618, 0.0
      %vm718 = vcmp.ge.f32.partialorder %v620, 0.0
      %vm719 = vcmp.ge.f32.partialorder %v623, 0.0
      %vm720 = vcmp.ge.f32.partialorder %v625, 0.0
      %vm721 = vcmp.ge.f32.partialorder %v628, 0.0
      %vm722 = vcmp.ge.f32.partialorder %v630, 0.0
      %vm723 = vcmp.ge.f32.partialorder %v633, 0.0
      %vm724 = vcmp.ge.f32.partialorder %v635, 0.0
      %vm725 = vcmp.ge.f32.partialorder %v638, 0.0
      %vm726 = vcmp.ge.f32.partialorder %v640, 0.0
      %vm727 = vcmp.ge.f32.partialorder %v643, 0.0
      %vm728 = vcmp.ge.f32.partialorder %v645, 0.0
      %vm729 = vcmp.ge.f32.partialorder %v648, 0.0
      %vm730 = vcmp.ge.f32.partialorder %v650, 0.0
      %vm731 = vcmp.ge.f32.partialorder %v653, 0.0
      %vm732 = vcmp.ge.f32.partialorder %v655, 0.0
      %vm733 = vcmp.ge.f32.partialorder %v658, 0.0
      %vm734 = vcmp.ge.f32.partialorder %v660, 0.0
      %vm735 = vcmp.ge.f32.partialorder %v663, 0.0
      %vm736 = vcmp.ge.f32.partialorder %v665, 0.0
      %vm737 = vcmp.ge.f32.partialorder %v668, 0.0
      %vm738 = vcmp.ge.f32.partialorder %v670, 0.0
      %vm739 = vcmp.ge.f32.partialorder %v673, 0.0
      %vm740 = vcmp.ge.f32.partialorder %v675, 0.0
      %v741 = vmul.f32 %v518, 0.1
      %v742 = vmul.f32 %v520, 0.1
      %v743 = vmul.f32 %v523, 0.1
      %v744 = vmul.f32 %v525, 0.1
      %v745 = vmul.f32 %v528, 0.1
      %v746 = vmul.f32 %v530, 0.1
      %v747 = vmul.f32 %v533, 0.1
      %v748 = vmul.f32 %v535, 0.1
      %v749 = vmul.f32 %v538, 0.1
      %v750 = vmul.f32 %v540, 0.1
      %v751 = vmul.f32 %v543, 0.1
      %v752 = vmul.f32 %v545, 0.1
      %v753 = vmul.f32 %v548, 0.1
      %v754 = vmul.f32 %v550, 0.1
      %v755 = vmul.f32 %v553, 0.1
      %v756 = vmul.f32 %v555, 0.1
      %v757 = vmul.f32 %v558, 0.1
      %v758 = vmul.f32 %v560, 0.1
      %v759 = vmul.f32 %v563, 0.1
      %v760 = vmul.f32 %v565, 0.1
      %v761 = vmul.f32 %v568, 0.1
      %v762 = vmul.f32 %v570, 0.1
      %v763 = vmul.f32 %v573, 0.1
      %v764 = vmul.f32 %v575, 0.1
      %v765 = vmul.f32 %v578, 0.1
      %v766 = vmul.f32 %v580, 0.1
      %v767 = vmul.f32 %v583, 0.1
      %v768 = vmul.f32 %v585, 0.1
      %v769 = vmul.f32 %v588, 0.1
      %v770 = vmul.f32 %v590, 0.1
      %v771 = vmul.f32 %v593, 0.1
      %v772 = vmul.f32 %v595, 0.1
      %v773 = vmul.f32 %v598, 0.1
      %v774 = vmul.f32 %v600, 0.1
      %v775 = vmul.f32 %v603, 0.1
      %v776 = vmul.f32 %v605, 0.1
      %v777 = vmul.f32 %v608, 0.1
      %v778 = vmul.f32 %v610, 0.1
      %v779 = vmul.f32 %v613, 0.1
      %v780 = vmul.f32 %v615, 0.1
      %v781 = vmul.f32 %v618, 0.1
      %v782 = vmul.f32 %v620, 0.1
      %v783 = vmul.f32 %v623, 0.1
      %v784 = vmul.f32 %v625, 0.1
      %v785 = vmul.f32 %v628, 0.1
      %v786 = vmul.f32 %v630, 0.1
      %v787 = vmul.f32 %v633, 0.1
      %v788 = vmul.f32 %v635, 0.1
      %v789 = vmul.f32 %v638, 0.1
      %v790 = vmul.f32 %v640, 0.1
      %v791 = vmul.f32 %v643, 0.1
      %v792 = vmul.f32 %v645, 0.1
      %v793 = vmul.f32 %v648, 0.1
      %v794 = vmul.f32 %v650, 0.1
      %v795 = vmul.f32 %v653, 0.1
      %v796 = vmul.f32 %v655, 0.1
      %v797 = vmul.f32 %v658, 0.1
      %v798 = vmul.f32 %v660, 0.1
      %v799 = vmul.f32 %v663, 0.1
      %v800 = vmul.f32 %v665, 0.1
      %v801 = vmul.f32 %v668, 0.1
      %v802 = vmul.f32 %v670, 0.1
      %v803 = vmul.f32 %v673, 0.1
      %v804 = vmul.f32 %v675, 0.1
      %v805 = vsel %vm677, %v518, %v741
      %v806 = vsel %vm678, %v520, %v742
      %v807 = vsel %vm679, %v523, %v743
      %v808 = vsel %vm680, %v525, %v744
      %v809 = vsel %vm681, %v528, %v745
      %v810 = vsel %vm682, %v530, %v746
      %v811 = vsel %vm683, %v533, %v747
      %v812 = vsel %vm684, %v535, %v748
      %v813 = vsel %vm685, %v538, %v749
      %v814 = vsel %vm686, %v540, %v750
      %v815 = vsel %vm687, %v543, %v751
      %v816 = vsel %vm688, %v545, %v752
      %v817 = vsel %vm689, %v548, %v753
      %v818 = vsel %vm690, %v550, %v754
      %v819 = vsel %vm691, %v553, %v755
      %v820 = vsel %vm692, %v555, %v756
      %v821 = vsel %vm693, %v558, %v757
      %v822 = vsel %vm694, %v560, %v758
      %v823 = vsel %vm695, %v563, %v759
      %v824 = vsel %vm696, %v565, %v760
      %v825 = vsel %vm697, %v568, %v761
      %v826 = vsel %vm698, %v570, %v762
      %v827 = vsel %vm699, %v573, %v763
      %v828 = vsel %vm700, %v575, %v764
      %v829 = vsel %vm701, %v578, %v765
      %v830 = vsel %vm702, %v580, %v766
      %v831 = vsel %vm703, %v583, %v767
      %v832 = vsel %vm704, %v585, %v768
      %v833 = vsel %vm705, %v588, %v769
      %v834 = vsel %vm706, %v590, %v770
      %v835 = vsel %vm707, %v593, %v771
      %v836 = vsel %vm708, %v595, %v772
      %v837 = vsel %vm709, %v598, %v773
      %v838 = vsel %vm710, %v600, %v774
      %v839 = vsel %vm711, %v603, %v775
      %v840 = vsel %vm712, %v605, %v776
      %v841 = vsel %vm713, %v608, %v777
      %v842 = vsel %vm714, %v610, %v778
      %v843 = vsel %vm715, %v613, %v779
      %v844 = vsel %vm716, %v615, %v780
      %v845 = vsel %vm717, %v618, %v781
      %v846 = vsel %vm718, %v620, %v782
      %v847 = vsel %vm719, %v623, %v783
      %v848 = vsel %vm720, %v625, %v784
      %v849 = vsel %vm721, %v628, %v785
      %v850 = vsel %vm722, %v630, %v786
      %v851 = vsel %vm723, %v633, %v787
      %v852 = vsel %vm724, %v635, %v788
      %v853 = vsel %vm725, %v638, %v789
      %v854 = vsel %vm726, %v640, %v790
      %v855 = vsel %vm727, %v643, %v791
      %v856 = vsel %vm728, %v645, %v792
      %v857 = vsel %vm729, %v648, %v793
      %v858 = vsel %vm730, %v650, %v794
      %v859 = vsel %vm731, %v653, %v795
      %v860 = vsel %vm732, %v655, %v796
      %v861 = vsel %vm733, %v658, %v797
      %v862 = vsel %vm734, %v660, %v798
      %v863 = vsel %vm735, %v663, %v799
      %v864 = vsel %vm736, %v665, %v800
      %v865 = vsel %vm737, %v668, %v801
      %v866 = vsel %vm738, %v670, %v802
      %v867 = vsel %vm739, %v673, %v803
      %v868 = vsel %vm740, %v675, %v804
      %vm869 = vcmask 261120
      %870 = vst.msk [vmem:[%s172] sm:$0xff] %vm869, %v805
      %871 = vst.msk [vmem:[%s172 + $0x8] sm:$0xff] %vm869, %v806
      %872 = vst.msk [vmem:[%s172 + $0x10] sm:$0xff] %vm869, %v807
      %873 = vst.msk [vmem:[%s172 + $0x18] sm:$0xff] %vm869, %v808
      %874 = vst.msk [vmem:[%s172 + $0x20] sm:$0xff] %vm869, %v809
      %875 = vst.msk [vmem:[%s172 + $0x28] sm:$0xff] %vm869, %v810
      %876 = vst.msk [vmem:[%s172 + $0x30] sm:$0xff] %vm869, %v811
      %877 = vst.msk [vmem:[%s172 + $0x38] sm:$0xff] %vm869, %v812
      %878 = vst.msk [vmem:[%s172 + $0x40] sm:$0xff] %vm869, %v813
      %879 = vst.msk [vmem:[%s172 + $0x48] sm:$0xff] %vm869, %v814
      %880 = vst.msk [vmem:[%s172 + $0x50] sm:$0xff] %vm869, %v815
      %881 = vst.msk [vmem:[%s172 + $0x58] sm:$0xff] %vm869, %v816
      %882 = vst.msk [vmem:[%s172 + $0x60] sm:$0xff] %vm869, %v817
      %883 = vst.msk [vmem:[%s172 + $0x68] sm:$0xff] %vm869, %v818
      %884 = vst.msk [vmem:[%s172 + $0x70] sm:$0xff] %vm869, %v819
      %885 = vst.msk [vmem:[%s172 + $0x78] sm:$0xff] %vm869, %v820
      %886 = vst.msk [vmem:[%s172 + $0x80] sm:$0xff] %vm869, %v821
      %887 = vst.msk [vmem:[%s172 + $0x88] sm:$0xff] %vm869, %v822
      %888 = vst.msk [vmem:[%s172 + $0x90] sm:$0xff] %vm869, %v823
      %889 = vst.msk [vmem:[%s172 + $0x98] sm:$0xff] %vm869, %v824
      %890 = vst.msk [vmem:[%s172 + $0xa0] sm:$0xff] %vm869, %v825
      %891 = vst.msk [vmem:[%s172 + $0xa8] sm:$0xff] %vm869, %v826
      %892 = vst.msk [vmem:[%s172 + $0xb0] sm:$0xff] %vm869, %v827
      %893 = vst.msk [vmem:[%s172 + $0xb8] sm:$0xff] %vm869, %v828
      %894 = vst.msk [vmem:[%s172 + $0xc0] sm:$0xff] %vm869, %v829
      %895 = vst.msk [vmem:[%s172 + $0xc8] sm:$0xff] %vm869, %v830
      %896 = vst.msk [vmem:[%s172 + $0xd0] sm:$0xff] %vm869, %v831
      %897 = vst.msk [vmem:[%s172 + $0xd8] sm:$0xff] %vm869, %v832
      %898 = vst.msk [vmem:[%s172 + $0xe0] sm:$0xff] %vm869, %v833
      %899 = vst.msk [vmem:[%s172 + $0xe8] sm:$0xff] %vm869, %v834
      %900 = vst.msk [vmem:[%s172 + $0xf0] sm:$0xff] %vm869, %v835
      %901 = vst.msk [vmem:[%s172 + $0xf8] sm:$0xff] %vm869, %v836
      %902 = vst.msk [vmem:[%s172 + $0x100] sm:$0xff] %vm869, %v837
      %903 = vst.msk [vmem:[%s172 + $0x108] sm:$0xff] %vm869, %v838
      %904 = vst.msk [vmem:[%s172 + $0x110] sm:$0xff] %vm869, %v839
      %905 = vst.msk [vmem:[%s172 + $0x118] sm:$0xff] %vm869, %v840
      %906 = vst.msk [vmem:[%s172 + $0x120] sm:$0xff] %vm869, %v841
      %907 = vst.msk [vmem:[%s172 + $0x128] sm:$0xff] %vm869, %v842
      %908 = vst.msk [vmem:[%s172 + $0x130] sm:$0xff] %vm869, %v843
      %909 = vst.msk [vmem:[%s172 + $0x138] sm:$0xff] %vm869, %v844
      %910 = vst.msk [vmem:[%s172 + $0x140] sm:$0xff] %vm869, %v845
      %911 = vst.msk [vmem:[%s172 + $0x148] sm:$0xff] %vm869, %v846
      %912 = vst.msk [vmem:[%s172 + $0x150] sm:$0xff] %vm869, %v847
      %913 = vst.msk [vmem:[%s172 + $0x158] sm:$0xff] %vm869, %v848
      %914 = vst.msk [vmem:[%s172 + $0x160] sm:$0xff] %vm869, %v849
      %915 = vst.msk [vmem:[%s172 + $0x168] sm:$0xff] %vm869, %v850
      %916 = vst.msk [vmem:[%s172 + $0x170] sm:$0xff] %vm869, %v851
      %917 = vst.msk [vmem:[%s172 + $0x178] sm:$0xff] %vm869, %v852
      %918 = vst.msk [vmem:[%s172 + $0x180] sm:$0xff] %vm869, %v853
      %919 = vst.msk [vmem:[%s172 + $0x188] sm:$0xff] %vm869, %v854
      %920 = vst.msk [vmem:[%s172 + $0x190] sm:$0xff] %vm869, %v855
      %921 = vst.msk [vmem:[%s172 + $0x198] sm:$0xff] %vm869, %v856
      %922 = vst.msk [vmem:[%s172 + $0x1a0] sm:$0xff] %vm869, %v857
      %923 = vst.msk [vmem:[%s172 + $0x1a8] sm:$0xff] %vm869, %v858
      %924 = vst.msk [vmem:[%s172 + $0x1b0] sm:$0xff] %vm869, %v859
      %925 = vst.msk [vmem:[%s172 + $0x1b8] sm:$0xff] %vm869, %v860
      %926 = vst.msk [vmem:[%s172 + $0x1c0] sm:$0xff] %vm869, %v861
      %927 = vst.msk [vmem:[%s172 + $0x1c8] sm:$0xff] %vm869, %v862
      %928 = vst.msk [vmem:[%s172 + $0x1d0] sm:$0xff] %vm869, %v863
      %929 = vst.msk [vmem:[%s172 + $0x1d8] sm:$0xff] %vm869, %v864
      %930 = vst.msk [vmem:[%s172 + $0x1e0] sm:$0xff] %vm869, %v865
      %931 = vst.msk [vmem:[%s172 + $0x1e8] sm:$0xff] %vm869, %v866
      %932 = vst.msk [vmem:[%s172 + $0x1f0] sm:$0xff] %vm869, %v867
      %933 = vst.msk [vmem:[%s172 + $0x1f8] sm:$0xff] %vm869, %v868
      %s934 = smul.u32 64, %s14
      %p935 = scmp.lt.s32.totalorder %s934, 127
      %s936 = scalar_select %p935, %s934, 127
      %s937 = smul.addr %s936, 8
      %s938 = scalar_lea.vmem %s3, %s937
      // Predicated region
      $region33: #{tpu_custom_call.1} parent=31 // pred_check
        %p939 = pneg %p100
      $region34: #{tpu_custom_call.1} parent=31 // pred_check_branch
        %941 = sbr.rel (%p939) target = $region36
      $region35: #{tpu_custom_call.1} parent=31 // pred_region
        %s942 = smul.u32 64, %s14
      $region36: #{tpu_custom_call.1} parent=31 // pred_fallthru
        _
    $region32: #{tpu_custom_call.1} parent=5 // pred_fallthru
      _
    %p943 = scmp.le.s32.totalorder 2, %s9
    // Predicated region
    $region37: #{tpu_custom_call.1} parent=5 // pred_check
      %p944 = pneg %p943
    $region38: #{tpu_custom_call.1} parent=5 // pred_check_branch
      %946 = sbr.rel (%p944) target = $region40
    $region39: #{tpu_custom_call.1} parent=5 // pred_region
      %s947 = ssub.s32 %s9, 2
      // Predicated region
      $region41: #{tpu_custom_call.1} parent=39 // pred_check
        %p948 = pneg %p106
      $region42: #{tpu_custom_call.1} parent=39 // pred_check_branch
        %950 = sbr.rel (%p948) target = $region44
      $region43: #{tpu_custom_call.1} parent=39 // pred_region
        %s951 = smul.u32 64, %s15
        %p952 = scmp.lt.s32.totalorder %s951, 127
        %s953 = scalar_select %p952, %s951, 127
        %s954 = smul.addr %s953, 8
        %s955 = scalar_lea.vmem %s3, %s954
      $region44: #{tpu_custom_call.1} parent=39 // pred_fallthru
        _
    $region40: #{tpu_custom_call.1} parent=5 // pred_fallthru
      _
  $region6: #{tpu_custom_call.1} parent=0 // loop_footer
    %s13 = sadd.s32 1, %s9
  $region7: #{tpu_custom_call.1} parent=0 // loop_footer_branch
    %8 = sbr.rel target = $region3
  $region8: #{tpu_custom_call.1} parent=0 // loop_exit
    _

</llo_original>
